<compile_context>
chip_gen: v5e
topology: v5e:2x2
jax: 0.10.0
libtpu: 0.0.40
codegen_flags: <defaults>
</compile_context>

<pallas_src>
import functools

import jax
import jax.numpy as jnp
from jax.experimental import pallas as pl
from jax.experimental.pallas import tpu as pltpu


# ----------------------------- kernel ----------------------------------------

def _fused_kernel(s_ref, w_ref, g_ref, b_ref, m_ref, o_ref, *, inv_cnt):
    """Composed Conv1d(k=3) + BatchNorm1d (batch stats) + ELU.

    s_ref: (C_tot, R + 2) input slab, channels on sublanes, time on lanes
           (batch-major, per-batch conv halo included).
    w_ref: (3, Cout, C_tot) conv-tap weights with the transposed-conv folded in.
    g_ref/b_ref: (Cout, 1) BatchNorm gamma / beta.
    m_ref: (1, R) 1.0 on valid output columns, 0.0 on per-batch junk columns.
    o_ref: (Cout, R) output (channels on sublanes, lane-dense columns).
    """
    R = o_ref.shape[1]
    x = s_ref[...]                                          # (C_tot, R+2)

    # Conv1d(k=3) over the composed slab == 3 lane-shifted channel matmuls.
    acc = jnp.dot(w_ref[0], x[:, 0:R], preferred_element_type=jnp.float32)
    acc = acc + jnp.dot(w_ref[1], x[:, 1:R + 1],
                        preferred_element_type=jnp.float32)
    acc = acc + jnp.dot(w_ref[2], x[:, 2:R + 2],
                        preferred_element_type=jnp.float32)

    # BatchNorm1d training-mode batch statistics (biased variance), one pass.
    m = m_ref[...]                                          # (1, R)
    s1 = jnp.sum(acc * m, axis=1, keepdims=True)            # (Cout, 1)
    s2 = jnp.sum(acc * acc * m, axis=1, keepdims=True)      # (Cout, 1)
    mu = s1 * inv_cnt
    var = s2 * inv_cnt - mu * mu
    yn = (acc - mu) * jax.lax.rsqrt(var + 1e-5) * g_ref[...] + b_ref[...]

    # ELU(alpha=1): exp only on the clamped negative branch (no overflow).
    # TODO(synk): jnp.expm1 would be marginally more faithful for tiny negatives.
    o_ref[...] = jnp.where(yn > 0, yn, jnp.exp(jnp.minimum(yn, 0.0)) - 1.0)


# ----------------------------- wrapper ----------------------------------------

def _full_spec(shape):
    return pl.BlockSpec(shape, lambda i, _s=shape: (0,) * len(_s))


def expand_forward(x1_ncl, x2_ncl, params):
    """x1_ncl: (N, Cin, L1), x2_ncl: (N, Cin//2, L2) -> (N, Cout, L2)."""
    w_up, b_up = params["w_up"], params["b_up"]          # (Cin, Ch, 2), (Ch,)
    w_conv = params["w_conv"]                            # (Cout, Cin, 3)
    gamma, beta = params["gamma"], params["beta"]        # (Cout,), (Cout,)

    N, Cin, L1 = x1_ncl.shape
    Ch = Cin // 2
    L2 = x2_ncl.shape[-1]
    Cout = w_conv.shape[0]
    two_l1 = 2 * L1
    diff = L2 - two_l1
    assert diff >= 0, "expected len(x2) >= 2 * len(x1)"
    pad_l = diff // 2
    pad_r = diff - pad_l
    Lp = L2 + 2                      # per-batch length incl. k=3 conv halo
    R = N * Lp                       # flattened (batch-major) column count
    C_tot = Ch + 2 * Cin + 1         # x2 | x1 even-phase | x1 odd-phase | bias
    f32 = jnp.float32

    # --- trace-time weight composition: fold ConvTranspose1d weights + bias
    # --- into the three Conv1d taps, so  y[:, t] = sum_k W_k @ slab[:, t+k].
    wc2 = w_conv[:, :Ch, :]                                   # x2 channel half
    wc1 = w_conv[:, Ch:, :]                                   # up(x1) channel half
    w_x2 = jnp.transpose(wc2, (2, 0, 1))                      # (3, Cout, Ch)
    w_even = jnp.einsum("qok,co->kqc", wc1, w_up[:, :, 0])    # (3, Cout, Cin)
    w_odd = jnp.einsum("qok,co->kqc", wc1, w_up[:, :, 1])     # (3, Cout, Cin)
    w_bias = jnp.einsum("qok,o->kq", wc1, b_up)[..., None]    # (3, Cout, 1)
    w_all = jnp.concatenate([w_x2, w_even, w_odd, w_bias],
                            axis=-1).astype(f32)              # (3, Cout, C_tot)

    # --- input slab (layout plumbing only; fuses on the XLA side): channels on
    # --- sublanes, time on lanes, per-batch zero halo, stride-2 up-sample grid
    # --- expressed as an even/odd phase split (no interleave needed anywhere).
    x2_pad = jnp.pad(x2_ncl, ((0, 0), (0, 0), (1, 1)))        # (N, Ch, Lp)
    s_par = jnp.arange(two_l1) % 2                            # parity on up grid
    x1_rep = jnp.repeat(x1_ncl, 2, axis=-1)                   # (N, Cin, 2*L1)
    x1_even = x1_rep * (s_par == 0).astype(f32)
    x1_odd = x1_rep * (s_par == 1).astype(f32)
    lpad, rpad = 1 + pad_l, 1 + pad_r                         # halo + F.pad
    grow = ((0, 0), (0, 0), (lpad, rpad))
    ones = jnp.ones((N, 1, two_l1), f32)                      # carries up-bias
    slab = jnp.concatenate([x2_pad,
                            jnp.pad(x1_even, grow),
                            jnp.pad(x1_odd, grow),
                            jnp.pad(ones, grow)], axis=1)     # (N, C_tot, Lp)
    slab = jnp.transpose(slab, (1, 0, 2)).reshape(C_tot, R)
    slab = jnp.pad(slab, ((0, 0), (0, 2)))                    # room for tap shifts

    # valid-output-column mask: last 2 columns of each batch block are junk
    # (their conv windows cross the batch boundary); excluded from BN stats.
    vmask = jnp.tile((jnp.arange(Lp) < L2).astype(f32), (N,)).reshape(1, R)

    kernel = functools.partial(_fused_kernel, inv_cnt=1.0 / float(N * L2))
    out_ext = pl.pallas_call(
        kernel,
        grid=(1,),
        in_specs=[_full_spec((C_tot, R + 2)),
                  _full_spec((3, Cout, C_tot)),
                  _full_spec((Cout, 1)),
                  _full_spec((Cout, 1)),
                  _full_spec((1, R))],
        out_specs=_full_spec((Cout, R)),
        out_shape=jax.ShapeDtypeStruct((Cout, R), f32),
        compiler_params=pltpu.CompilerParams(
            dimension_semantics=("arbitrary",)),
        # TODO(synk): at real sizes, tile the column axis (parallel grid for the
        # two v7x TensorCores, L-tiled BlockSpecs within v7x's 64 MiB VMEM) and
        # turn BatchNorm into a cross-tile sum/sumsq reduction.
    )(slab, w_all, gamma.reshape(Cout, 1).astype(f32),
      beta.reshape(Cout, 1).astype(f32), vmask)

    # (Cout, N, Lp) -> drop junk columns -> (N, Cout, L2)
    return jnp.transpose(out_ext.reshape(Cout, N, Lp)[:, :, :L2], (1, 0, 2))


# ----------------------------- pure-JAX reference ----------------------------

def expand_reference(x1_ncl, x2_ncl, params):
    w_up, b_up = params["w_up"], params["b_up"]
    w_conv = params["w_conv"]
    gamma, beta = params["gamma"], params["beta"]
    N, Cin, L1 = x1_ncl.shape
    L2 = x2_ncl.shape[-1]
    # ConvTranspose1d(k=2, s=2): out[n, o, 2l+k] = sum_c x[n,c,l] w[c,o,k] + b
    y = jnp.einsum("ncl,cok->nolk", x1_ncl, w_up).reshape(N, Cin // 2, 2 * L1)
    y = y + b_up[None, :, None]
    diff = L2 - 2 * L1
    y = jnp.pad(y, ((0, 0), (0, 0), (diff // 2, diff - diff // 2)))
    x = jnp.concatenate([x2_ncl, y], axis=1)             # (N, Cin, L2)
    xp = jnp.pad(x, ((0, 0), (0, 0), (1, 1)))
    conv = sum(jnp.einsum("ncl,oc->nol", xp[:, :, k:k + L2], w_conv[:, :, k])
               for k in range(3))
    mu = jnp.mean(conv, axis=(0, 2), keepdims=True)
    var = jnp.mean((conv - mu) ** 2, axis=(0, 2), keepdims=True)
    yn = (conv - mu) * jax.lax.rsqrt(var + 1e-5)
    yn = yn * gamma[None, :, None] + beta[None, :, None]
    return jnp.where(yn > 0, yn, jnp.exp(jnp.minimum(yn, 0.0)) - 1.0)


# ----------------------------- main ------------------------------------------

if __name__ == "__main__":
    key = jax.random.PRNGKey(0)
    k1, k2, k3, k4, k5 = jax.random.split(key, 5)

    N, input_ch, output_ch = 2, 8, 8
    L1, L2 = 7, 16                       # up(x1) has length 14 -> pad (1, 1)
    Ch = input_ch // 2

    x1 = jax.random.normal(k1, (N, input_ch, L1), jnp.float32)
    x2 = jax.random.normal(k2, (N, Ch, L2), jnp.float32)

    params = dict(
        w_up=0.3 * jax.random.normal(k3, (input_ch, Ch, 2), jnp.float32),
        b_up=0.1 * jax.random.normal(k4, (Ch,), jnp.float32),
        w_conv=0.2 * jax.random.normal(k5, (output_ch, input_ch, 3), jnp.float32),
        gamma=jnp.ones((output_ch,), jnp.float32),   # PyTorch BN default init
        beta=jnp.zeros((output_ch,), jnp.float32),
    )

    out = expand_forward(x1, x2, params)
    jax.block_until_ready(out)

    ref = expand_reference(x1, x2, params)
    assert out.shape == (N, output_ch, L2), out.shape
    assert bool(jnp.allclose(out, ref, atol=1e-4, rtol=1e-4)), "mismatch vs reference"

    print("KERNEL_OK")
</pallas_src>

<mosaic_0001>
module attributes {stable_mosaic.version = 11 : i64} {
  func.func @_fused_kernel(%arg0: i32, %arg1: memref<21x38xf32, #tpu.memory_space<vmem>>, %arg2: memref<3x8x21xf32, #tpu.memory_space<vmem>>, %arg3: memref<8x1xf32, #tpu.memory_space<vmem>>, %arg4: memref<8x1xf32, #tpu.memory_space<vmem>>, %arg5: memref<1x36xf32, #tpu.memory_space<vmem>>, %arg6: memref<8x36xf32, #tpu.memory_space<vmem>>) attributes {dimension_semantics = [#tpu.dimension_semantics<arbitrary>], iteration_bounds = array<i64: 1>, scalar_prefetch = 0 : i64, scratch_operands = 0 : i64, tpu.core_type = #tpu.core_type<tc>, window_params = [{pipeline_mode = #tpu.pipeline_mode<synchronous>, transform_indices = @transform_0, window_bounds = array<i64: 21, 38>}, {pipeline_mode = #tpu.pipeline_mode<synchronous>, transform_indices = @transform_1, window_bounds = array<i64: 3, 8, 21>}, {pipeline_mode = #tpu.pipeline_mode<synchronous>, transform_indices = @transform_2, window_bounds = array<i64: 8, 1>}, {pipeline_mode = #tpu.pipeline_mode<synchronous>, transform_indices = @transform_3, window_bounds = array<i64: 8, 1>}, {pipeline_mode = #tpu.pipeline_mode<synchronous>, transform_indices = @transform_4, window_bounds = array<i64: 1, 36>}, {pipeline_mode = #tpu.pipeline_mode<synchronous>, transform_indices = @transform_5, window_bounds = array<i64: 8, 36>}]} {
    %c0 = arith.constant 0 : index
    %c0_0 = arith.constant 0 : index
    %0 = vector.load %arg1[%c0, %c0_0] : memref<21x38xf32, #tpu.memory_space<vmem>>, vector<21x38xf32>
    %c0_1 = arith.constant 0 : index
    %c0_2 = arith.constant 0 : index
    %c0_3 = arith.constant 0 : index
    %1 = vector.load %arg2[%c0_1, %c0_2, %c0_3] : memref<3x8x21xf32, #tpu.memory_space<vmem>>, vector<1x8x21xf32>
    %2 = vector.shape_cast %1 : vector<1x8x21xf32> to vector<8x21xf32>
    %3 = vector.extract_strided_slice %0 {offsets = [0, 0], sizes = [21, 36], strides = [1, 1]} : vector<21x38xf32> to vector<21x36xf32>
    %cst = arith.constant dense<0.000000e+00> : vector<8x36xf32>
    %4 = tpu.matmul %2, %3, %cst {dimension_numbers = #tpu.dot_dimension_numbers<[1], [0], [0], [1], [0, 0, 1, 1], [], []>} : vector<8x21xf32>, vector<21x36xf32>, vector<8x36xf32> -> vector<8x36xf32>
    %c1 = arith.constant 1 : index
    %c0_4 = arith.constant 0 : index
    %c0_5 = arith.constant 0 : index
    %5 = vector.load %arg2[%c1, %c0_4, %c0_5] : memref<3x8x21xf32, #tpu.memory_space<vmem>>, vector<1x8x21xf32>
    %6 = vector.shape_cast %5 : vector<1x8x21xf32> to vector<8x21xf32>
    %7 = vector.extract_strided_slice %0 {offsets = [0, 1], sizes = [21, 36], strides = [1, 1]} : vector<21x38xf32> to vector<21x36xf32>
    %cst_6 = arith.constant dense<0.000000e+00> : vector<8x36xf32>
    %8 = tpu.matmul %6, %7, %cst_6 {dimension_numbers = #tpu.dot_dimension_numbers<[1], [0], [0], [1], [0, 0, 1, 1], [], []>} : vector<8x21xf32>, vector<21x36xf32>, vector<8x36xf32> -> vector<8x36xf32>
    %9 = arith.addf %4, %8 : vector<8x36xf32>
    %c2 = arith.constant 2 : index
    %c0_7 = arith.constant 0 : index
    %c0_8 = arith.constant 0 : index
    %10 = vector.load %arg2[%c2, %c0_7, %c0_8] : memref<3x8x21xf32, #tpu.memory_space<vmem>>, vector<1x8x21xf32>
    %11 = vector.shape_cast %10 : vector<1x8x21xf32> to vector<8x21xf32>
    %12 = vector.extract_strided_slice %0 {offsets = [0, 2], sizes = [21, 36], strides = [1, 1]} : vector<21x38xf32> to vector<21x36xf32>
    %cst_9 = arith.constant dense<0.000000e+00> : vector<8x36xf32>
    %13 = tpu.matmul %11, %12, %cst_9 {dimension_numbers = #tpu.dot_dimension_numbers<[1], [0], [0], [1], [0, 0, 1, 1], [], []>} : vector<8x21xf32>, vector<21x36xf32>, vector<8x36xf32> -> vector<8x36xf32>
    %14 = arith.addf %9, %13 : vector<8x36xf32>
    %c0_10 = arith.constant 0 : index
    %c0_11 = arith.constant 0 : index
    %15 = vector.load %arg5[%c0_10, %c0_11] : memref<1x36xf32, #tpu.memory_space<vmem>>, vector<1x36xf32>
    %16 = vector.broadcast %15 : vector<1x36xf32> to vector<8x36xf32>
    %17 = arith.mulf %14, %16 : vector<8x36xf32>
    %cst_12 = arith.constant dense<0.000000e+00> : vector<8xf32>
    %18 = vector.multi_reduction <add>, %17, %cst_12 [1] : vector<8x36xf32> to vector<8xf32>
    %19 = vector.shape_cast %18 : vector<8xf32> to vector<8x1xf32>
    %20 = arith.mulf %14, %14 : vector<8x36xf32>
    %21 = vector.broadcast %15 : vector<1x36xf32> to vector<8x36xf32>
    %22 = arith.mulf %20, %21 : vector<8x36xf32>
    %cst_13 = arith.constant dense<0.000000e+00> : vector<8xf32>
    %23 = vector.multi_reduction <add>, %22, %cst_13 [1] : vector<8x36xf32> to vector<8xf32>
    %24 = vector.shape_cast %23 : vector<8xf32> to vector<8x1xf32>
    %cst_14 = arith.constant 3.125000e-02 : f32
    %25 = vector.broadcast %cst_14 : f32 to vector<8x1xf32>
    %26 = arith.mulf %19, %25 : vector<8x1xf32>
    %cst_15 = arith.constant 3.125000e-02 : f32
    %27 = vector.broadcast %cst_15 : f32 to vector<8x1xf32>
    %28 = arith.mulf %24, %27 : vector<8x1xf32>
    %29 = arith.mulf %26, %26 : vector<8x1xf32>
    %30 = arith.subf %28, %29 : vector<8x1xf32>
    %31 = vector.broadcast %26 : vector<8x1xf32> to vector<8x36xf32>
    %32 = arith.subf %14, %31 : vector<8x36xf32>
    %cst_16 = arith.constant 9.99999974E-6 : f32
    %33 = vector.broadcast %cst_16 : f32 to vector<8x1xf32>
    %34 = arith.addf %30, %33 : vector<8x1xf32>
    %35 = math.rsqrt %34 : vector<8x1xf32>
    %36 = vector.broadcast %35 : vector<8x1xf32> to vector<8x36xf32>
    %37 = arith.mulf %32, %36 : vector<8x36xf32>
    %c0_17 = arith.constant 0 : index
    %c0_18 = arith.constant 0 : index
    %38 = vector.load %arg3[%c0_17, %c0_18] : memref<8x1xf32, #tpu.memory_space<vmem>>, vector<8x1xf32>
    %39 = vector.broadcast %38 : vector<8x1xf32> to vector<8x36xf32>
    %40 = arith.mulf %37, %39 : vector<8x36xf32>
    %c0_19 = arith.constant 0 : index
    %c0_20 = arith.constant 0 : index
    %41 = vector.load %arg4[%c0_19, %c0_20] : memref<8x1xf32, #tpu.memory_space<vmem>>, vector<8x1xf32>
    %42 = vector.broadcast %41 : vector<8x1xf32> to vector<8x36xf32>
    %43 = arith.addf %40, %42 : vector<8x36xf32>
    %cst_21 = arith.constant 0.000000e+00 : f32
    %44 = vector.broadcast %cst_21 : f32 to vector<8x36xf32>
    %45 = arith.cmpf ogt, %43, %44 : vector<8x36xf32>
    %cst_22 = arith.constant 0.000000e+00 : f32
    %46 = vector.broadcast %cst_22 : f32 to vector<8x36xf32>
    %47 = arith.minimumf %43, %46 : vector<8x36xf32>
    %48 = math.exp %47 : vector<8x36xf32>
    %cst_23 = arith.constant 1.000000e+00 : f32
    %49 = vector.broadcast %cst_23 : f32 to vector<8x36xf32>
    %50 = arith.subf %48, %49 : vector<8x36xf32>
    %51 = arith.select %45, %43, %50 : vector<8x36xi1>, vector<8x36xf32>
    %c0_24 = arith.constant 0 : index
    %c0_25 = arith.constant 0 : index
    %52 = vector.load %arg6[%c0_24, %c0_25] : memref<8x36xf32, #tpu.memory_space<vmem>>, vector<8x36xf32>
    tpu.vector_store %arg6[%c0_24, %c0_25], %51 {strides = array<i32>} : memref<8x36xf32, #tpu.memory_space<vmem>>, vector<8x36xf32>,
    return
  }
  func.func @transform_0(%arg0: i32) -> (i32, i32) {
    %c0_i32 = arith.constant 0 : i32
    %c0_i32_0 = arith.constant 0 : i32
    %c0_i32_1 = arith.constant 0 : i32
    return %c0_i32, %c0_i32_0 : i32, i32
  }
  func.func @transform_1(%arg0: i32) -> (i32, i32, i32) {
    %c0_i32 = arith.constant 0 : i32
    %c0_i32_0 = arith.constant 0 : i32
    %c0_i32_1 = arith.constant 0 : i32
    %c0_i32_2 = arith.constant 0 : i32
    return %c0_i32, %c0_i32_0, %c0_i32_1 : i32, i32, i32
  }
  func.func @transform_2(%arg0: i32) -> (i32, i32) {
    %c0_i32 = arith.constant 0 : i32
    %c0_i32_0 = arith.constant 0 : i32
    %c0_i32_1 = arith.constant 0 : i32
    return %c0_i32, %c0_i32_0 : i32, i32
  }
  func.func @transform_3(%arg0: i32) -> (i32, i32) {
    %c0_i32 = arith.constant 0 : i32
    %c0_i32_0 = arith.constant 0 : i32
    %c0_i32_1 = arith.constant 0 : i32
    return %c0_i32, %c0_i32_0 : i32, i32
  }
  func.func @transform_4(%arg0: i32) -> (i32, i32) {
    %c0_i32 = arith.constant 0 : i32
    %c0_i32_0 = arith.constant 0 : i32
    %c0_i32_1 = arith.constant 0 : i32
    return %c0_i32, %c0_i32_0 : i32, i32
  }
  func.func @transform_5(%arg0: i32) -> (i32, i32) {
    %c0_i32 = arith.constant 0 : i32
    %c0_i32_0 = arith.constant 0 : i32
    %c0_i32_1 = arith.constant 0 : i32
    return %c0_i32, %c0_i32_0 : i32, i32
  }
}

</mosaic_0001>

<llo_original>
// kernel: tpu_custom_call.1
$region0: #{tpu_custom_call.1}
  #allocation0 [shape = 'u32[]', space=smem, size = 0x4, offset = 0x4, fixed_abs, tag = 'smem constant byte address 0x4 - core index']
  #allocation1 [shape = 'u32[72,128]{1,0:T(1,128)}', space=vmem, size = 0x9000, scoped, tag = 'internal scratch']
  %s0 = inlined_call_operand.hbm [shape: f32[21,38], index: 0, kind: input, shape index: {}]
  %s1 = inlined_call_operand.hbm [shape: f32[3,8,21], index: 1, kind: input, shape index: {}]
  %s2 = inlined_call_operand.vmem [shape: f32[8,1], index: 2, kind: input, shape index: {}]
  %s3 = inlined_call_operand.vmem [shape: f32[8,1], index: 3, kind: input, shape index: {}]
  %s4 = inlined_call_operand.vmem [shape: f32[1,36], index: 4, kind: input, shape index: {}]
  %s5 = inlined_call_operand.hbm [shape: f32[8,36], index: 5, kind: output, shape index: {}]
  %s6 = sld [smem:[#allocation0]]
  $region38: #{tpu_custom_call.1} parent=0
    _
  %s8 = ssub.s32 1, %s6
  %s9 = scalar_select 0, %s8, %s6
  $region1: #{tpu_custom_call.1} parent=0
    #allocation2 [shape = 'u8[12288]{0}', space=vmem, size = 0x3000, scoped, tag = 'input window, operand 0, single buffered']
    #allocation3 [shape = 's32[1]{0}', space=sflag, size = 0x4, scoped, tag = 'scoped memory for tpu_custom_call.1']
    #allocation4 [shape = 's32[1]{0}', space=sflag, size = 0x4, scoped, tag = 'scoped memory for tpu_custom_call.1']
    #allocation5 [shape = 'u8[12288]{0}', space=vmem, size = 0x3000, scoped, tag = 'input window, operand 1, single buffered']
    #allocation6 [shape = 's32[1]{0}', space=sflag, size = 0x4, scoped, tag = 'scoped memory for tpu_custom_call.1']
    #allocation7 [shape = 'u8[4096]{0}', space=vmem, size = 0x1000, scoped, tag = 'output window, operand 0, single buffered']
    %10 = vsyncpa [#allocation3], 0
    %11 = vsyncpa [#allocation6], 0
    %12 = vsyncpa [#allocation4], 0
    // Predicated region
    $region2: #{tpu_custom_call.1} parent=1 // pred_check
      _
    $region3: #{tpu_custom_call.1} parent=1 // pred_check_branch
      %14 = sbr.rel (0) target = $region5
    $region4: #{tpu_custom_call.1} parent=1 // pred_region
      %16 = vsyncadd [#allocation3], 0
      %s17 = sshll.u32 %s0, 4
      %s18 = int_to_ptr.hbm [resolvable:$true] %s17
      %s19 = sshll.u32 [#allocation2], 4
      %s20 = int_to_ptr.vmem [resolvable:$true] %s19
      %25 = dma.hbm_to_vmem [thread:$0]  %s18, 384, %s20, [#allocation3], 128, 128, 8
    $region5: #{tpu_custom_call.1} parent=1 // pred_fallthru
      _
    // Predicated region
    $region6: #{tpu_custom_call.1} parent=1 // pred_check
      _
    $region7: #{tpu_custom_call.1} parent=1 // pred_check_branch
      %27 = sbr.rel (0) target = $region9
    $region8: #{tpu_custom_call.1} parent=1 // pred_region
      %29 = vsyncadd [#allocation6], 0
      %s30 = sshll.u32 %s1, 4
      %s31 = int_to_ptr.hbm [resolvable:$true] %s30
      %s32 = sshll.u32 [#allocation5], 4
      %s33 = int_to_ptr.vmem [resolvable:$true] %s32
      %38 = dma.hbm_to_vmem [thread:$0]  %s31, 384, %s33, [#allocation6], 128, 128, 8
    $region9: #{tpu_custom_call.1} parent=1 // pred_fallthru
      _
    // Predicated region
    $region10: #{tpu_custom_call.1} parent=1 // pred_check
      _
    $region11: #{tpu_custom_call.1} parent=1 // pred_check_branch
      %40 = sbr.rel (0) target = $region13
    $region12: #{tpu_custom_call.1} parent=1 // pred_region
      _
    $region13: #{tpu_custom_call.1} parent=1 // pred_fallthru
      _
    // Predicated region
    $region14: #{tpu_custom_call.1} parent=1 // pred_check
      _
    $region15: #{tpu_custom_call.1} parent=1 // pred_check_branch
      %42 = sbr.rel (0) target = $region17
    $region16: #{tpu_custom_call.1} parent=1 // pred_region
      _
    $region17: #{tpu_custom_call.1} parent=1 // pred_fallthru
      _
    // Predicated region
    $region18: #{tpu_custom_call.1} parent=1 // pred_check
      _
    $region19: #{tpu_custom_call.1} parent=1 // pred_check_branch
      %44 = sbr.rel (0) target = $region21
    $region20: #{tpu_custom_call.1} parent=1 // pred_region
      _
    $region21: #{tpu_custom_call.1} parent=1 // pred_fallthru
      _
    // Predicated region
    $region22: #{tpu_custom_call.1} parent=1 // pred_check
      _
    $region23: #{tpu_custom_call.1} parent=1 // pred_check_branch
      %46 = sbr.rel (0) target = $region25
    $region24: #{tpu_custom_call.1} parent=1 // pred_region
      %48 = dma.done [#allocation3], 384
    $region25: #{tpu_custom_call.1} parent=1 // pred_fallthru
      _
    // Predicated region
    $region26: #{tpu_custom_call.1} parent=1 // pred_check
      _
    $region27: #{tpu_custom_call.1} parent=1 // pred_check_branch
      %50 = sbr.rel (0) target = $region29
    $region28: #{tpu_custom_call.1} parent=1 // pred_region
      %52 = dma.done [#allocation6], 384
    $region29: #{tpu_custom_call.1} parent=1 // pred_fallthru
      _
    %v53 = vld [vmem:[#allocation2] sm:$0xff]
    %v54 = vld [vmem:[#allocation2 + $0x8] sm:$0xff]
    %v55 = vld [vmem:[#allocation2 + $0x10] sm:$0x1f]
    %v56 = vld [vmem:[#allocation5] sm:$0xff]
    %s57 = scalar_lea.vmem [#allocation5], 8
    %v58 = vld [vmem:[%s57] sm:$0xff]
    %62 = vrot.lane.b32.xlu0 %v53, 127
    %v63 = vpop.permute.xlu0 %62
    %64 = vrot.lane.b32.xlu0 %v54, 127
    %v65 = vpop.permute.xlu0 %64
    %66 = vrot.lane.b32.xlu0 %v55, 127
    %v67 = vpop.permute.xlu0 %66
    %vm70 = vcmask 171008
    %v72 = vsel %vm70, %v58, 0
    %vm74 = vcmask 1044480
    %v75 = vsel %vm74, %v67, 0
    %77 = vmatpush.msra.mxu0 0.0
    %78 = vmatpush.msra.mxu0 0.0
    %79 = vmatpush.msra.mxu0 0.0
    %80 = vmatpush.msra.mxu0 0.0
    %81 = vmatpush.msra.mxu0 0.0
    %82 = vmatpush.msra.mxu0 0.0
    %83 = vmatpush.msra.mxu0 0.0
    %84 = vmatpush.msra.mxu0 0.0
    %85 = vmatpush.msra.mxu0 0.0
    %86 = vmatpush.msra.mxu0 0.0
    %87 = vmatpush.msra.mxu0 0.0
    %88 = vmatpush.msra.mxu0 0.0
    %89 = vmatpush.msra.mxu0 0.0
    %90 = vmatpush.msra.mxu0 %v75
    %91 = vmatpush.msra.mxu0 %v65
    %92 = vmatpush.msra.mxu0 %v63
    %93 = vmatmul.f32.gmra.mxu0 %v72
    %v94 = vpop.f32.mrf.mxu0
    %v95 = vadd.f32 0.0, %v94
    %96 = vdwg.mxu0
    %v98 = vsel %vm70, %v56, 0
    %v100 = vsel %vm74, %v55, 0
    %102 = vmatpush.msra.mxu0 0.0
    %103 = vmatpush.msra.mxu0 0.0
    %104 = vmatpush.msra.mxu0 0.0
    %105 = vmatpush.msra.mxu0 0.0
    %106 = vmatpush.msra.mxu0 0.0
    %107 = vmatpush.msra.mxu0 0.0
    %108 = vmatpush.msra.mxu0 0.0
    %109 = vmatpush.msra.mxu0 0.0
    %110 = vmatpush.msra.mxu0 0.0
    %111 = vmatpush.msra.mxu0 0.0
    %112 = vmatpush.msra.mxu0 0.0
    %113 = vmatpush.msra.mxu0 0.0
    %114 = vmatpush.msra.mxu0 0.0
    %115 = vmatpush.msra.mxu0 %v100
    %116 = vmatpush.msra.mxu0 %v54
    %117 = vmatpush.msra.mxu0 %v53
    %118 = vmatmul.f32.gmra.mxu0 %v98
    %v119 = vpop.f32.mrf.mxu0
    %v120 = vadd.f32 %v95, %v119
    %121 = vdwg.mxu0
    %s122 = scalar_lea.vmem [#allocation5], 16
    %v123 = vld [vmem:[%s122] sm:$0xff]
    %124 = vrot.lane.b32.xlu0 %v53, 126
    %v125 = vpop.permute.xlu0 %124
    %126 = vrot.lane.b32.xlu0 %v54, 126
    %v127 = vpop.permute.xlu0 %126
    %128 = vrot.lane.b32.xlu0 %v55, 126
    %v129 = vpop.permute.xlu0 %128
    %v133 = vsel %vm70, %v123, 0
    %v135 = vsel %vm74, %v129, 0
    %137 = vmatpush.msra.mxu0 0.0
    %138 = vmatpush.msra.mxu0 0.0
    %139 = vmatpush.msra.mxu0 0.0
    %140 = vmatpush.msra.mxu0 0.0
    %141 = vmatpush.msra.mxu0 0.0
    %142 = vmatpush.msra.mxu0 0.0
    %143 = vmatpush.msra.mxu0 0.0
    %144 = vmatpush.msra.mxu0 0.0
    %145 = vmatpush.msra.mxu0 0.0
    %146 = vmatpush.msra.mxu0 0.0
    %147 = vmatpush.msra.mxu0 0.0
    %148 = vmatpush.msra.mxu0 0.0
    %149 = vmatpush.msra.mxu0 0.0
    %150 = vmatpush.msra.mxu0 %v135
    %151 = vmatpush.msra.mxu0 %v127
    %152 = vmatpush.msra.mxu0 %v125
    %153 = vmatmul.f32.gmra.mxu0 %v133
    %v154 = vpop.f32.mrf.mxu0
    %v155 = vadd.f32 0.0, %v154
    %156 = vdwg.mxu0
    %v157 = vadd.f32 %v120, %v155
    %v158 = vld [vmem:[%s4] sm:$0x1]
    %v160 = vperm.slane %v158, 0
    %v162 = vmul.f32 %v157, %v160
    %vm163 = vcmask 293888
    %v164 = vsel %vm163, %v162, 0.0
    %165 = vadd.xlane.f32.xlu0 %v164
    %v166 = vpop.xlane.xlu0 %165
    %v167 = vmul.f32 %v157, %v157
    %v168 = vmul.f32 %v167, %v160
    %v169 = vsel %vm163, %v168, 0.0
    %170 = vadd.xlane.f32.xlu0 %v169
    %v171 = vpop.xlane.xlu0 %170
    %v172 = vmul.f32 %v166, 0.03125
    %v173 = vmul.f32 %v171, 0.03125
    %v174 = vmul.f32 %v172, %v172
    %v175 = vsub.f32 %v173, %v174
    %v176 = vsub.f32 %v157, %v172
    %v177 = vadd.f32 %v175, 1e-05
    %v178 = vrsqrt.pop %v177
    %v179 = vmul.f32 %v178, %v177
    %v180 = vmul.f32 %v179, %v178
    %v181 = vmul.f32 0.5, %v180
    %v182 = vsub.f32 1.5, %v181
    %v183 = vmul.f32 %v178, %v182
    %vm184 = vweird.f32 %v177
    %vm185 = vweird.f32 %v178
    %vm186 = vmor %vm184, %vm185
    %v187 = vsel %vm186, %v178, %v183
    %v188 = vmul.f32 %v176, %v187
    %v189 = vld [vmem:[%s2] sm:$0xff]
    %191 = vset.pattern.permute.xlu0 0
    %192 = vperm.xlu0 %191, %v189
    %v193 = vpop.permute.xlu0 %192
    %v195 = vmul.f32 %v188, %v193
    %v196 = vld [vmem:[%s3] sm:$0xff]
    %198 = vset.pattern.permute.xlu0 0
    %199 = vperm.xlu0 %198, %v196
    %v200 = vpop.permute.xlu0 %199
    %v202 = vadd.f32 %v195, %v200
    %vm203 = vcmp.gt.f32.partialorder %v202, 0.0
    %v204 = vmin.f32 %v202, 0.0
    %v205 = vmul.f32 %v204, 1.442695
    %v206 = vpow.pop %v205
    %v207 = vsub.f32 %v206, 1.0
    %v208 = vsel %vm203, %v202, %v207
    %209 = vst.msk [vmem:[#allocation7] sm:$0xff] %vm163, %v208
    // Predicated region
    $region30: #{tpu_custom_call.1} parent=1 // pred_check
      _
    $region31: #{tpu_custom_call.1} parent=1 // pred_check_branch
      %211 = sbr.rel (0) target = $region33
    $region32: #{tpu_custom_call.1} parent=1 // pred_region
      %213 = vsyncadd [#allocation4], 0
      %s215 = sshll.u32 [#allocation7], 4
      %s216 = int_to_ptr.vmem [resolvable:$true] %s215
      %s217 = sshll.u32 %s5, 4
      %s218 = int_to_ptr.hbm [resolvable:$true] %s217
      %220 = dma.vmem_to_hbm [thread:$0]  %s216, 128, %s218, [#allocation4]
    $region33: #{tpu_custom_call.1} parent=1 // pred_fallthru
      _
    // Predicated region
    $region34: #{tpu_custom_call.1} parent=1 // pred_check
      _
    $region35: #{tpu_custom_call.1} parent=1 // pred_check_branch
      %222 = sbr.rel (0) target = $region37
    $region36: #{tpu_custom_call.1} parent=1 // pred_region
      %224 = dma.done [#allocation4], 128
    $region37: #{tpu_custom_call.1} parent=1 // pred_fallthru
      _
    %225 = vsyncpa [#allocation3], 1
    %226 = vsyncpa [#allocation6], 1
    %227 = vsyncpa [#allocation4], 1

</llo_original>
